<compile_context>
chip_gen: v6e
topology: v6e:2x2x1
jax: 0.10.0
libtpu: 0.0.40
codegen_flags: <defaults>
</compile_context>

<pallas_src>
import jax
import jax.numpy as jnp
from jax.experimental import pallas as pl
from jax.experimental.pallas import tpu as pltpu

_IN_FEATURES = 32
_OUT_FEATURES = 2
_W_SUBLANE_PAD = 8                      # weight rows padded to one sublane group
_LANE = 128
_VMEM_TILE_BUDGET = 24 * 1024 * 1024    # double-buffered tile footprint cap (v7x-safe)


def _round_up(n: int, m: int) -> int:
    return (n + m - 1) // m * m


def _round_down(n: int, m: int) -> int:
    return (n // m) * m


def fold_params(w1, b1, w2, b2):
    """Fold Linear(32,2) followed by Linear(2,2) into one affine map."""
    hi = jax.lax.Precision.HIGHEST
    w = jnp.dot(w1, w2, precision=hi)        # (32, 2)
    b = jnp.dot(b1, w2, precision=hi) + b2   # (1, 2)
    return w, b


def _fused_linear_kernel(x_ref, wt_ref, bt_ref, ot_ref):
    """ot = (Wt @ x^T)[:2] + bt   (lane-dense, transposed output tile).

    x_ref : (TB, 32)  activation tile (f32 or bf16)
    wt_ref: (8, 32)   folded weight, transposed, sublane-padded (x dtype)
    bt_ref: (2, 1)    folded bias, transposed (f32)
    ot_ref: (2, TB)   f32 output: features on sublanes, batch on lanes
    """
    yt = jax.lax.dot_general(
        wt_ref[...], x_ref[...],
        dimension_numbers=(((1,), (1,)), ((), ())),   # contract K; rhs transposed
        preferred_element_type=jnp.float32,
        precision=jax.lax.Precision.HIGHEST,          # full-precision f32 accumulate
    )
    ot_ref[...] = (yt[:_OUT_FEATURES, :] + bt_ref[...]).astype(ot_ref.dtype)


def _pallas_fused_forward(x, wt_pad, bt, *, block_rows):
    batch, k = x.shape
    x_bytes = jnp.dtype(x.dtype).itemsize

    # VMEM bytes per batch row of tile footprint: double-buffered x block +
    # double-buffered (sublane-padded in VMEM) output block.
    bytes_per_row = 2 * k * x_bytes + 2 * _W_SUBLANE_PAD * 4
    max_rows = max(_LANE, _round_down(_VMEM_TILE_BUDGET // bytes_per_row, _LANE))

    # 128-lane-aligned batch tile: as big as requested, but capped by the
    # batch itself, the VMEM budget, and a ">= 2 grid tiles" rule so both
    # v7x TensorCores get work (harmless one extra step on v5e/v6e).
    tb = _round_up(min(block_rows, batch, max_rows), _LANE)
    tb = min(tb, _round_up(pl.cdiv(batch, 2), _LANE))
    tb = max(tb, _LANE)

    grid = pl.cdiv(batch, tb)                       # ragged last block OK: compute
    vmem_need = tb * bytes_per_row + (8 << 20)      # is row-independent, padded
                                                    # output columns are dropped.
    out_t = pl.pallas_call(
        _fused_linear_kernel,
        out_shape=jax.ShapeDtypeStruct((_OUT_FEATURES, batch), jnp.float32),
        grid=(grid,),
        in_specs=[
            pl.BlockSpec((tb, k), lambda i: (i, 0)),               # x tile
            pl.BlockSpec((_W_SUBLANE_PAD, k), lambda i: (0, 0)),   # Wt (revisited)
            pl.BlockSpec((_OUT_FEATURES, 1), lambda i: (0, 0)),    # bt (revisited)
        ],
        out_specs=pl.BlockSpec((_OUT_FEATURES, tb), lambda i: (0, i)),
        compiler_params=pltpu.CompilerParams(
            dimension_semantics=("parallel",),
            vmem_limit_bytes=int(vmem_need),
        ),
    )(x, wt_pad, bt)

    # Back to the module's (B, 2) layout; tiny (8 B/row) transpose in XLA.
    return out_t.T


def dummy_module_forward(x, w1, b1, w2, b2, *, block_rows=32768,
                         min_pallas_batch=131072, force_pallas=False):
    """DummyModule.forward: x (B, 32) -> (B, 2) f32."""
    w, b = fold_params(w1, b1, w2, b2)
    batch = x.shape[0]

    if not force_pallas and batch < min_pallas_batch:
        # Small/medium batches: pallas launch + grid overhead can't beat the
        # XLA fused GEMV (whole problem is a couple of MB of HBM traffic).
        return (jnp.dot(x.astype(jnp.float32), w) + b).astype(jnp.float32)

    # Cast only the (tiny) weights to x's dtype — never x itself (that would
    # be an extra full HBM pass).  A bf16 producer therefore halves the
    # dominant read stream for free; accumulation/bias/output stay f32.
    cdt = x.dtype
    wt_pad = (jnp.zeros((_W_SUBLANE_PAD, _IN_FEATURES), cdt)
              .at[:_OUT_FEATURES].set(w.T.astype(cdt)))
    bt = b.T.astype(jnp.float32)                    # (2, 1)

    return _pallas_fused_forward(x, wt_pad, bt, block_rows=block_rows)


def init_params(key):
    """torch.nn.Linear-style shapes/init (weights stored as (in, out))."""
    k1, k2, k3, k4 = jax.random.split(key, 4)
    bound1 = 1.0 / jnp.sqrt(32.0)
    bound2 = 1.0 / jnp.sqrt(2.0)
    w1 = jax.random.uniform(k1, (32, 2), jnp.float32, -bound1, bound1)
    b1 = jax.random.uniform(k2, (1, 2), jnp.float32, -bound1, bound1)
    w2 = jax.random.uniform(k3, (2, 2), jnp.float32, -bound2, bound2)
    b2 = jax.random.uniform(k4, (1, 2), jnp.float32, -bound2, bound2)
    return w1, b1, w2, b2


if __name__ == "__main__":
    key = jax.random.PRNGKey(0)
    k_x1, k_x2, k_x3, k_p = jax.random.split(key, 4)
    hi = jax.lax.Precision.HIGHEST

    w1, b1, w2, b2 = init_params(k_p)
    w_f, b_f = fold_params(w1, b1, w2, b2)

    # --- 1) spec-sized input (batch=2, in=32); force the Pallas path so the
    #        kernel itself is exercised (dispatcher would hand B=2 to XLA). ---
    x = jax.random.normal(k_x1, (2, 32), jnp.float32)
    out = jax.block_until_ready(
        dummy_module_forward(x, w1, b1, w2, b2, force_pallas=True))
    ref_unfused = jnp.dot(jnp.dot(x, w1, precision=hi) + b1, w2,
                          precision=hi) + b2
    assert out.shape == (2, 2)
    # Kernel matmul runs at HIGHEST precision -> tight f32 tolerance.
    assert jnp.allclose(out, ref_unfused, atol=1e-4, rtol=1e-4)

    # --- 2) ragged, multi-tile grid (batch=333 not a multiple of 128;
    #        block_rows=128 -> 3 "parallel" tiles, last one padded). ----------
    xm = jax.random.normal(k_x2, (333, 32), jnp.float32)
    refm = jnp.dot(xm, w_f, precision=hi) + b_f
    outm = jax.block_until_ready(
        dummy_module_forward(xm, w1, b1, w2, b2, block_rows=128,
                             force_pallas=True))
    assert outm.shape == (333, 2)
    assert jnp.allclose(outm, refm, atol=1e-4, rtol=1e-4)

    # --- 3) bf16 producer (weights follow x's dtype; no extra pass over x). --
    xb = jax.random.normal(k_x3, (512, 32), jnp.float32)
    refb = jnp.dot(xb, w_f, precision=hi) + b_f
    outb = jax.block_until_ready(
        dummy_module_forward(xb.astype(jnp.bfloat16), w1, b1, w2, b2,
                             force_pallas=True))
    assert outb.shape == (512, 2)
    assert outb.dtype == jnp.float32
    assert jnp.allclose(outb, refb, atol=5e-2, rtol=5e-2)

    print("KERNEL_OK")
</pallas_src>

<mosaic_0001>
module attributes {stable_mosaic.version = 11 : i64} {
  func.func @_fused_linear_kernel(%arg0: i32, %arg1: memref<128x32xf32, #tpu.memory_space<vmem>>, %arg2: memref<8x32xf32, #tpu.memory_space<vmem>>, %arg3: memref<2x1xf32, #tpu.memory_space<vmem>>, %arg4: memref<2x128xf32, #tpu.memory_space<vmem>>) attributes {dimension_semantics = [#tpu.dimension_semantics<parallel>], iteration_bounds = array<i64: 1>, scalar_prefetch = 0 : i64, scratch_operands = 0 : i64, tpu.core_type = #tpu.core_type<tc>, window_params = [{transform_indices = @transform_0, window_bounds = array<i64: 128, 32>}, {pipeline_mode = #tpu.pipeline_mode<synchronous>, transform_indices = @transform_1, window_bounds = array<i64: 8, 32>}, {pipeline_mode = #tpu.pipeline_mode<synchronous>, transform_indices = @transform_2, window_bounds = array<i64: 2, 1>}, {transform_indices = @transform_3, window_bounds = array<i64: 2, 128>}]} {
    %c0 = arith.constant 0 : index
    %c0_0 = arith.constant 0 : index
    %0 = vector.load %arg2[%c0, %c0_0] : memref<8x32xf32, #tpu.memory_space<vmem>>, vector<8x32xf32>
    %c0_1 = arith.constant 0 : index
    %c0_2 = arith.constant 0 : index
    %1 = vector.load %arg1[%c0_1, %c0_2] : memref<128x32xf32, #tpu.memory_space<vmem>>, vector<128x32xf32>
    %cst = arith.constant dense<0.000000e+00> : vector<8x128xf32>
    %2 = tpu.matmul %0, %1, %cst {dimension_numbers = #tpu.dot_dimension_numbers<[1], [1], [0], [0], [0, 0, 1, 0], [], []>, precision = #tpu.contract_precision<fp32>} : vector<8x32xf32>, vector<128x32xf32>, vector<8x128xf32> -> vector<8x128xf32>
    %3 = vector.extract_strided_slice %2 {offsets = [0, 0], sizes = [2, 128], strides = [1, 1]} : vector<8x128xf32> to vector<2x128xf32>
    %c0_3 = arith.constant 0 : index
    %c0_4 = arith.constant 0 : index
    %4 = vector.load %arg3[%c0_3, %c0_4] : memref<2x1xf32, #tpu.memory_space<vmem>>, vector<2x1xf32>
    %5 = vector.broadcast %4 : vector<2x1xf32> to vector<2x128xf32>
    %6 = arith.addf %3, %5 : vector<2x128xf32>
    %c0_5 = arith.constant 0 : index
    %c0_6 = arith.constant 0 : index
    %7 = vector.load %arg4[%c0_5, %c0_6] : memref<2x128xf32, #tpu.memory_space<vmem>>, vector<2x128xf32>
    tpu.vector_store %arg4[%c0_5, %c0_6], %6 {strides = array<i32>} : memref<2x128xf32, #tpu.memory_space<vmem>>, vector<2x128xf32>,
    return
  }
  func.func @transform_0(%arg0: i32) -> (i32, i32) {
    %c0_i32 = arith.constant 0 : i32
    %c0_i32_0 = arith.constant 0 : i32
    return %arg0, %c0_i32 : i32, i32
  }
  func.func @transform_1(%arg0: i32) -> (i32, i32) {
    %c0_i32 = arith.constant 0 : i32
    %c0_i32_0 = arith.constant 0 : i32
    %c0_i32_1 = arith.constant 0 : i32
    return %c0_i32, %c0_i32_0 : i32, i32
  }
  func.func @transform_2(%arg0: i32) -> (i32, i32) {
    %c0_i32 = arith.constant 0 : i32
    %c0_i32_0 = arith.constant 0 : i32
    %c0_i32_1 = arith.constant 0 : i32
    return %c0_i32, %c0_i32_0 : i32, i32
  }
  func.func @transform_3(%arg0: i32) -> (i32, i32) {
    %c0_i32 = arith.constant 0 : i32
    %c0_i32_0 = arith.constant 0 : i32
    return %c0_i32, %arg0 : i32, i32
  }
}

</mosaic_0001>

<llo_original>
// kernel: tpu_custom_call.1
$region0: #{tpu_custom_call.1}
  #allocation0 [shape = 'u32[]', space=smem, size = 0x4, offset = 0x4, fixed_abs, tag = 'smem constant byte address 0x4 - core index']
  #allocation1 [shape = 'u32[144,128]{1,0:T(1,128)}', space=vmem, size = 0x12000, scoped, tag = 'internal scratch']
  %s0 = inlined_call_operand.vmem [shape: f32[2,32], index: 0, kind: input, shape index: {}]
  %s1 = inlined_call_operand.hbm [shape: f32[8,32], index: 1, kind: input, shape index: {}]
  %s2 = inlined_call_operand.vmem [shape: f32[2,1], index: 2, kind: input, shape index: {}]
  %s3 = inlined_call_operand.hbm [shape: f32[2,2], index: 3, kind: output, shape index: {}]
  %s4 = sld [smem:[#allocation0]]
  $region26: #{tpu_custom_call.1} parent=0
    _
  %s6 = ssub.s32 1, %s4
  %s7 = scalar_select 0, %s6, %s4
  $region1: #{tpu_custom_call.1} parent=0
    #allocation2 [shape = 'u8[4096]{0}', space=vmem, size = 0x1000, scoped, tag = 'input window, operand 1, single buffered']
    #allocation3 [shape = 's32[1]{0}', space=sflag, size = 0x4, scoped, tag = 'scoped memory for tpu_custom_call.1']
    #allocation4 [shape = 's32[1]{0}', space=sflag, size = 0x4, scoped, tag = 'scoped memory for tpu_custom_call.1']
    #allocation5 [shape = 'u8[1024]{0}', space=vmem, size = 0x400, scoped, tag = 'output window, operand 0, single buffered']
    %8 = vsyncpa [#allocation3], 0
    %9 = vsyncpa [#allocation4], 0
    // Predicated region
    $region2: #{tpu_custom_call.1} parent=1 // pred_check
      _
    $region3: #{tpu_custom_call.1} parent=1 // pred_check_branch
      %11 = sbr.rel (0) target = $region5
    $region4: #{tpu_custom_call.1} parent=1 // pred_region
      _
    $region5: #{tpu_custom_call.1} parent=1 // pred_fallthru
      _
    // Predicated region
    $region6: #{tpu_custom_call.1} parent=1 // pred_check
      _
    $region7: #{tpu_custom_call.1} parent=1 // pred_check_branch
      %13 = sbr.rel (0) target = $region9
    $region8: #{tpu_custom_call.1} parent=1 // pred_region
      %s15 = ssub.s32 128, 128
      %16 = vsyncadd [#allocation3], %s15
      %s18 = sshll.u32 [#allocation2], 4
      %s19 = int_to_ptr.vmem [resolvable:$true] %s18
      %21 = dma.hbm_to_vmem [thread:$0]  %s1, 128, %s19, [#allocation3]
    $region9: #{tpu_custom_call.1} parent=1 // pred_fallthru
      _
    // Predicated region
    $region10: #{tpu_custom_call.1} parent=1 // pred_check
      _
    $region11: #{tpu_custom_call.1} parent=1 // pred_check_branch
      %23 = sbr.rel (0) target = $region13
    $region12: #{tpu_custom_call.1} parent=1 // pred_region
      _
    $region13: #{tpu_custom_call.1} parent=1 // pred_fallthru
      _
    // Predicated region
    $region14: #{tpu_custom_call.1} parent=1 // pred_check
      _
    $region15: #{tpu_custom_call.1} parent=1 // pred_check_branch
      %25 = sbr.rel (0) target = $region17
    $region16: #{tpu_custom_call.1} parent=1 // pred_region
      %26 = dma.done [#allocation3], 128
    $region17: #{tpu_custom_call.1} parent=1 // pred_fallthru
      _
    %v27 = vld [vmem:[#allocation2] sm:$0xff]
    %v28 = vld [vmem:[%s0] sm:$0xff]
    %v29 = vld [vmem:[%s0 + $0x8] sm:$0xff]
    %v30 = vld [vmem:[%s0 + $0x10] sm:$0xff]
    %v31 = vld [vmem:[%s0 + $0x18] sm:$0xff]
    %v32 = vld [vmem:[%s0 + $0x20] sm:$0xff]
    %v33 = vld [vmem:[%s0 + $0x28] sm:$0xff]
    %v34 = vld [vmem:[%s0 + $0x30] sm:$0xff]
    %v35 = vld [vmem:[%s0 + $0x38] sm:$0xff]
    %v36 = vld [vmem:[%s0 + $0x40] sm:$0xff]
    %v37 = vld [vmem:[%s0 + $0x48] sm:$0xff]
    %v38 = vld [vmem:[%s0 + $0x50] sm:$0xff]
    %v39 = vld [vmem:[%s0 + $0x58] sm:$0xff]
    %v40 = vld [vmem:[%s0 + $0x60] sm:$0xff]
    %v41 = vld [vmem:[%s0 + $0x68] sm:$0xff]
    %v42 = vld [vmem:[%s0 + $0x70] sm:$0xff]
    %v43 = vld [vmem:[%s0 + $0x78] sm:$0xff]
    %vm44 = vcmask 261120
    %v46 = vsel %vm44, %v27, 0
    %v49 = vsel %vm44, %v28, 0
    %v52 = vsel %vm44, %v29, 0
    %v55 = vsel %vm44, %v30, 0
    %v58 = vsel %vm44, %v31, 0
    %v61 = vsel %vm44, %v32, 0
    %v64 = vsel %vm44, %v33, 0
    %v67 = vsel %vm44, %v34, 0
    %v70 = vsel %vm44, %v35, 0
    %v73 = vsel %vm44, %v36, 0
    %v76 = vsel %vm44, %v37, 0
    %v79 = vsel %vm44, %v38, 0
    %v82 = vsel %vm44, %v39, 0
    %v85 = vsel %vm44, %v40, 0
    %v88 = vsel %vm44, %v41, 0
    %v91 = vsel %vm44, %v42, 0
    %v94 = vsel %vm44, %v43, 0
    %96 = vmatprep.subr.mxu0 0.0
    %v97 = vand.u32 %v94, 4294901760
    %98 = vmatpush1.xpose.msra.mxu0 %v97
    %99 = vmatprep.subr.mxu0 0.0
    %v100 = vand.u32 %v91, 4294901760
    %101 = vmatpush1.xpose.msra.mxu0 %v100
    %102 = vmatprep.subr.mxu0 0.0
    %v103 = vand.u32 %v88, 4294901760
    %104 = vmatpush1.xpose.msra.mxu0 %v103
    %105 = vmatprep.subr.mxu0 0.0
    %v106 = vand.u32 %v85, 4294901760
    %107 = vmatpush1.xpose.msra.mxu0 %v106
    %108 = vmatprep.subr.mxu0 0.0
    %v109 = vand.u32 %v82, 4294901760
    %110 = vmatpush1.xpose.msra.mxu0 %v109
    %111 = vmatprep.subr.mxu0 0.0
    %v112 = vand.u32 %v79, 4294901760
    %113 = vmatpush1.xpose.msra.mxu0 %v112
    %114 = vmatprep.subr.mxu0 0.0
    %v115 = vand.u32 %v76, 4294901760
    %116 = vmatpush1.xpose.msra.mxu0 %v115
    %117 = vmatprep.subr.mxu0 0.0
    %v118 = vand.u32 %v73, 4294901760
    %119 = vmatpush1.xpose.msra.mxu0 %v118
    %120 = vmatprep.subr.mxu0 0.0
    %v121 = vand.u32 %v70, 4294901760
    %122 = vmatpush1.xpose.msra.mxu0 %v121
    %123 = vmatprep.subr.mxu0 0.0
    %v124 = vand.u32 %v67, 4294901760
    %125 = vmatpush1.xpose.msra.mxu0 %v124
    %126 = vmatprep.subr.mxu0 0.0
    %v127 = vand.u32 %v64, 4294901760
    %128 = vmatpush1.xpose.msra.mxu0 %v127
    %129 = vmatprep.subr.mxu0 0.0
    %v130 = vand.u32 %v61, 4294901760
    %131 = vmatpush1.xpose.msra.mxu0 %v130
    %132 = vmatprep.subr.mxu0 0.0
    %v133 = vand.u32 %v58, 4294901760
    %134 = vmatpush1.xpose.msra.mxu0 %v133
    %135 = vmatprep.subr.mxu0 0.0
    %v136 = vand.u32 %v55, 4294901760
    %137 = vmatpush1.xpose.msra.mxu0 %v136
    %138 = vmatprep.subr.mxu0 0.0
    %v139 = vand.u32 %v52, 4294901760
    %140 = vmatpush1.xpose.msra.mxu0 %v139
    %141 = vmatprep.subr.mxu0 0.0
    %v142 = vand.u32 %v49, 4294901760
    %143 = vmatpush1.xpose.msra.mxu0 %v142
    %144 = vmatprep.subr.mxu0 0.0
    %145 = vmatpush2.xpose.msra.mxu0 0.0
    %146 = vmatprep.subr.mxu0 0.0
    %147 = vmatpush2.xpose.msra.mxu0 0.0
    %148 = vmatprep.subr.mxu0 0.0
    %149 = vmatpush2.xpose.msra.mxu0 0.0
    %150 = vmatprep.subr.mxu0 0.0
    %151 = vmatpush2.xpose.msra.mxu0 0.0
    %152 = vmatprep.subr.mxu0 0.0
    %153 = vmatpush2.xpose.msra.mxu0 0.0
    %154 = vmatprep.subr.mxu0 0.0
    %155 = vmatpush2.xpose.msra.mxu0 0.0
    %156 = vmatprep.subr.mxu0 0.0
    %157 = vmatpush2.xpose.msra.mxu0 0.0
    %158 = vmatprep.subr.mxu0 0.0
    %159 = vmatpush2.xpose.msra.mxu0 0.0
    %160 = vmatprep.subr.mxu0 0.0
    %161 = vmatpush2.xpose.msra.mxu0 0.0
    %162 = vmatprep.subr.mxu0 0.0
    %163 = vmatpush2.xpose.msra.mxu0 0.0
    %164 = vmatprep.subr.mxu0 0.0
    %165 = vmatpush2.xpose.msra.mxu0 0.0
    %166 = vmatprep.subr.mxu0 0.0
    %167 = vmatpush2.xpose.msra.mxu0 0.0
    %168 = vmatprep.subr.mxu0 0.0
    %169 = vmatpush2.xpose.msra.mxu0 0.0
    %170 = vmatprep.subr.mxu0 0.0
    %171 = vmatpush2.xpose.msra.mxu0 0.0
    %172 = vmatprep.subr.mxu0 0.0
    %173 = vmatpush2.xpose.msra.mxu0 0.0
    %174 = vmatprep.subr.mxu0 0.0
    %175 = vmatpush2.xpose.msra.mxu0 0.0
    %176 = vmatprep.mubr.f32.mxu0 0.0
    %v177 = vand.u32 %v46, 4294901760
    %v178 = vsub.f32 %v46, %v177
    %v179 = vand.u32 %v178, 4294901760
    %v180 = vsub.f32 %v178, %v179
    %v181 = vand.u32 %v180, 4294901760
    %182 = vmatmul.mubr.f32.gmra.mxu0 %v181
    %v183 = vpop.f32.mrf.mxu0
    %v184 = vadd.f32 0.0, %v183
    %v185 = vpop.f32.mrf.mxu0
    %186 = vdwg.mxu0
    %187 = vmatprep.subr.mxu0 0.0
    %v188 = vand.u32 %v94, 4294901760
    %v189 = vsub.f32 %v94, %v188
    %v190 = vand.u32 %v189, 4294901760
    %v191 = vsub.f32 %v189, %v190
    %v192 = vand.u32 %v191, 4294901760
    %193 = vmatpush1.xpose.msra.mxu0 %v192
    %194 = vmatprep.subr.mxu0 0.0
    %v195 = vand.u32 %v91, 4294901760
    %v196 = vsub.f32 %v91, %v195
    %v197 = vand.u32 %v196, 4294901760
    %v198 = vsub.f32 %v196, %v197
    %v199 = vand.u32 %v198, 4294901760
    %200 = vmatpush1.xpose.msra.mxu0 %v199
    %201 = vmatprep.subr.mxu0 0.0
    %v202 = vand.u32 %v88, 4294901760
    %v203 = vsub.f32 %v88, %v202
    %v204 = vand.u32 %v203, 4294901760
    %v205 = vsub.f32 %v203, %v204
    %v206 = vand.u32 %v205, 4294901760
    %207 = vmatpush1.xpose.msra.mxu0 %v206
    %208 = vmatprep.subr.mxu0 0.0
    %v209 = vand.u32 %v85, 4294901760
    %v210 = vsub.f32 %v85, %v209
    %v211 = vand.u32 %v210, 4294901760
    %v212 = vsub.f32 %v210, %v211
    %v213 = vand.u32 %v212, 4294901760
    %214 = vmatpush1.xpose.msra.mxu0 %v213
    %215 = vmatprep.subr.mxu0 0.0
    %v216 = vand.u32 %v82, 4294901760
    %v217 = vsub.f32 %v82, %v216
    %v218 = vand.u32 %v217, 4294901760
    %v219 = vsub.f32 %v217, %v218
    %v220 = vand.u32 %v219, 4294901760
    %221 = vmatpush1.xpose.msra.mxu0 %v220
    %222 = vmatprep.subr.mxu0 0.0
    %v223 = vand.u32 %v79, 4294901760
    %v224 = vsub.f32 %v79, %v223
    %v225 = vand.u32 %v224, 4294901760
    %v226 = vsub.f32 %v224, %v225
    %v227 = vand.u32 %v226, 4294901760
    %228 = vmatpush1.xpose.msra.mxu0 %v227
    %229 = vmatprep.subr.mxu0 0.0
    %v230 = vand.u32 %v76, 4294901760
    %v231 = vsub.f32 %v76, %v230
    %v232 = vand.u32 %v231, 4294901760
    %v233 = vsub.f32 %v231, %v232
    %v234 = vand.u32 %v233, 4294901760
    %235 = vmatpush1.xpose.msra.mxu0 %v234
    %236 = vmatprep.subr.mxu0 0.0
    %v237 = vand.u32 %v73, 4294901760
    %v238 = vsub.f32 %v73, %v237
    %v239 = vand.u32 %v238, 4294901760
    %v240 = vsub.f32 %v238, %v239
    %v241 = vand.u32 %v240, 4294901760
    %242 = vmatpush1.xpose.msra.mxu0 %v241
    %243 = vmatprep.subr.mxu0 0.0
    %v244 = vand.u32 %v70, 4294901760
    %v245 = vsub.f32 %v70, %v244
    %v246 = vand.u32 %v245, 4294901760
    %v247 = vsub.f32 %v245, %v246
    %v248 = vand.u32 %v247, 4294901760
    %249 = vmatpush1.xpose.msra.mxu0 %v248
    %250 = vmatprep.subr.mxu0 0.0
    %v251 = vand.u32 %v67, 4294901760
    %v252 = vsub.f32 %v67, %v251
    %v253 = vand.u32 %v252, 4294901760
    %v254 = vsub.f32 %v252, %v253
    %v255 = vand.u32 %v254, 4294901760
    %256 = vmatpush1.xpose.msra.mxu0 %v255
    %257 = vmatprep.subr.mxu0 0.0
    %v258 = vand.u32 %v64, 4294901760
    %v259 = vsub.f32 %v64, %v258
    %v260 = vand.u32 %v259, 4294901760
    %v261 = vsub.f32 %v259, %v260
    %v262 = vand.u32 %v261, 4294901760
    %263 = vmatpush1.xpose.msra.mxu0 %v262
    %264 = vmatprep.subr.mxu0 0.0
    %v265 = vand.u32 %v61, 4294901760
    %v266 = vsub.f32 %v61, %v265
    %v267 = vand.u32 %v266, 4294901760
    %v268 = vsub.f32 %v266, %v267
    %v269 = vand.u32 %v268, 4294901760
    %270 = vmatpush1.xpose.msra.mxu0 %v269
    %271 = vmatprep.subr.mxu0 0.0
    %v272 = vand.u32 %v58, 4294901760
    %v273 = vsub.f32 %v58, %v272
    %v274 = vand.u32 %v273, 4294901760
    %v275 = vsub.f32 %v273, %v274
    %v276 = vand.u32 %v275, 4294901760
    %277 = vmatpush1.xpose.msra.mxu0 %v276
    %278 = vmatprep.subr.mxu0 0.0
    %v279 = vand.u32 %v55, 4294901760
    %v280 = vsub.f32 %v55, %v279
    %v281 = vand.u32 %v280, 4294901760
    %v282 = vsub.f32 %v280, %v281
    %v283 = vand.u32 %v282, 4294901760
    %284 = vmatpush1.xpose.msra.mxu0 %v283
    %285 = vmatprep.subr.mxu0 0.0
    %v286 = vand.u32 %v52, 4294901760
    %v287 = vsub.f32 %v52, %v286
    %v288 = vand.u32 %v287, 4294901760
    %v289 = vsub.f32 %v287, %v288
    %v290 = vand.u32 %v289, 4294901760
    %291 = vmatpush1.xpose.msra.mxu0 %v290
    %292 = vmatprep.subr.mxu0 0.0
    %v293 = vand.u32 %v49, 4294901760
    %v294 = vsub.f32 %v49, %v293
    %v295 = vand.u32 %v294, 4294901760
    %v296 = vsub.f32 %v294, %v295
    %v297 = vand.u32 %v296, 4294901760
    %298 = vmatpush1.xpose.msra.mxu0 %v297
    %299 = vmatprep.subr.mxu0 0.0
    %300 = vmatpush2.xpose.msra.mxu0 0.0
    %301 = vmatprep.subr.mxu0 0.0
    %302 = vmatpush2.xpose.msra.mxu0 0.0
    %303 = vmatprep.subr.mxu0 0.0
    %304 = vmatpush2.xpose.msra.mxu0 0.0
    %305 = vmatprep.subr.mxu0 0.0
    %306 = vmatpush2.xpose.msra.mxu0 0.0
    %307 = vmatprep.subr.mxu0 0.0
    %308 = vmatpush2.xpose.msra.mxu0 0.0
    %309 = vmatprep.subr.mxu0 0.0
    %310 = vmatpush2.xpose.msra.mxu0 0.0
    %311 = vmatprep.subr.mxu0 0.0
    %312 = vmatpush2.xpose.msra.mxu0 0.0
    %313 = vmatprep.subr.mxu0 0.0
    %314 = vmatpush2.xpose.msra.mxu0 0.0
    %315 = vmatprep.subr.mxu0 0.0
    %316 = vmatpush2.xpose.msra.mxu0 0.0
    %317 = vmatprep.subr.mxu0 0.0
    %318 = vmatpush2.xpose.msra.mxu0 0.0
    %319 = vmatprep.subr.mxu0 0.0
    %320 = vmatpush2.xpose.msra.mxu0 0.0
    %321 = vmatprep.subr.mxu0 0.0
    %322 = vmatpush2.xpose.msra.mxu0 0.0
    %323 = vmatprep.subr.mxu0 0.0
    %324 = vmatpush2.xpose.msra.mxu0 0.0
    %325 = vmatprep.subr.mxu0 0.0
    %326 = vmatpush2.xpose.msra.mxu0 0.0
    %327 = vmatprep.subr.mxu0 0.0
    %328 = vmatpush2.xpose.msra.mxu0 0.0
    %329 = vmatprep.subr.mxu0 0.0
    %330 = vmatpush2.xpose.msra.mxu0 0.0
    %331 = vmatprep.mubr.f32.mxu0 0.0
    %v332 = vand.u32 %v46, 4294901760
    %333 = vmatmul.mubr.f32.gmra.mxu0 %v332
    %v334 = vpop.f32.mrf.mxu0
    %v335 = vadd.f32 %v184, %v334
    %v336 = vpop.f32.mrf.mxu0
    %337 = vdwg.mxu0
    %338 = vmatprep.subr.mxu0 0.0
    %v339 = vand.u32 %v94, 4294901760
    %v340 = vsub.f32 %v94, %v339
    %341 = vmatpush1.xpose.msra.mxu0 %v340
    %342 = vmatprep.subr.mxu0 0.0
    %v343 = vand.u32 %v91, 4294901760
    %v344 = vsub.f32 %v91, %v343
    %345 = vmatpush1.xpose.msra.mxu0 %v344
    %346 = vmatprep.subr.mxu0 0.0
    %v347 = vand.u32 %v88, 4294901760
    %v348 = vsub.f32 %v88, %v347
    %349 = vmatpush1.xpose.msra.mxu0 %v348
    %350 = vmatprep.subr.mxu0 0.0
    %v351 = vand.u32 %v85, 4294901760
    %v352 = vsub.f32 %v85, %v351
    %353 = vmatpush1.xpose.msra.mxu0 %v352
    %354 = vmatprep.subr.mxu0 0.0
    %v355 = vand.u32 %v82, 4294901760
    %v356 = vsub.f32 %v82, %v355
    %357 = vmatpush1.xpose.msra.mxu0 %v356
    %358 = vmatprep.subr.mxu0 0.0
    %v359 = vand.u32 %v79, 4294901760
    %v360 = vsub.f32 %v79, %v359
    %361 = vmatpush1.xpose.msra.mxu0 %v360
    %362 = vmatprep.subr.mxu0 0.0
    %v363 = vand.u32 %v76, 4294901760
    %v364 = vsub.f32 %v76, %v363
    %365 = vmatpush1.xpose.msra.mxu0 %v364
    %366 = vmatprep.subr.mxu0 0.0
    %v367 = vand.u32 %v73, 4294901760
    %v368 = vsub.f32 %v73, %v367
    %369 = vmatpush1.xpose.msra.mxu0 %v368
    %370 = vmatprep.subr.mxu0 0.0
    %v371 = vand.u32 %v70, 4294901760
    %v372 = vsub.f32 %v70, %v371
    %373 = vmatpush1.xpose.msra.mxu0 %v372
    %374 = vmatprep.subr.mxu0 0.0
    %v375 = vand.u32 %v67, 4294901760
    %v376 = vsub.f32 %v67, %v375
    %377 = vmatpush1.xpose.msra.mxu0 %v376
    %378 = vmatprep.subr.mxu0 0.0
    %v379 = vand.u32 %v64, 4294901760
    %v380 = vsub.f32 %v64, %v379
    %381 = vmatpush1.xpose.msra.mxu0 %v380
    %382 = vmatprep.subr.mxu0 0.0
    %v383 = vand.u32 %v61, 4294901760
    %v384 = vsub.f32 %v61, %v383
    %385 = vmatpush1.xpose.msra.mxu0 %v384
    %386 = vmatprep.subr.mxu0 0.0
    %v387 = vand.u32 %v58, 4294901760
    %v388 = vsub.f32 %v58, %v387
    %389 = vmatpush1.xpose.msra.mxu0 %v388
    %390 = vmatprep.subr.mxu0 0.0
    %v391 = vand.u32 %v55, 4294901760
    %v392 = vsub.f32 %v55, %v391
    %393 = vmatpush1.xpose.msra.mxu0 %v392
    %394 = vmatprep.subr.mxu0 0.0
    %v395 = vand.u32 %v52, 4294901760
    %v396 = vsub.f32 %v52, %v395
    %397 = vmatpush1.xpose.msra.mxu0 %v396
    %398 = vmatprep.subr.mxu0 0.0
    %v399 = vand.u32 %v49, 4294901760
    %v400 = vsub.f32 %v49, %v399
    %401 = vmatpush1.xpose.msra.mxu0 %v400
    %402 = vmatprep.subr.mxu0 0.0
    %403 = vmatpush2.xpose.msra.mxu0 0.0
    %404 = vmatprep.subr.mxu0 0.0
    %405 = vmatpush2.xpose.msra.mxu0 0.0
    %406 = vmatprep.subr.mxu0 0.0
    %407 = vmatpush2.xpose.msra.mxu0 0.0
    %408 = vmatprep.subr.mxu0 0.0
    %409 = vmatpush2.xpose.msra.mxu0 0.0
    %410 = vmatprep.subr.mxu0 0.0
    %411 = vmatpush2.xpose.msra.mxu0 0.0
    %412 = vmatprep.subr.mxu0 0.0
    %413 = vmatpush2.xpose.msra.mxu0 0.0
    %414 = vmatprep.subr.mxu0 0.0
    %415 = vmatpush2.xpose.msra.mxu0 0.0
    %416 = vmatprep.subr.mxu0 0.0
    %417 = vmatpush2.xpose.msra.mxu0 0.0
    %418 = vmatprep.subr.mxu0 0.0
    %419 = vmatpush2.xpose.msra.mxu0 0.0
    %420 = vmatprep.subr.mxu0 0.0
    %421 = vmatpush2.xpose.msra.mxu0 0.0
    %422 = vmatprep.subr.mxu0 0.0
    %423 = vmatpush2.xpose.msra.mxu0 0.0
    %424 = vmatprep.subr.mxu0 0.0
    %425 = vmatpush2.xpose.msra.mxu0 0.0
    %426 = vmatprep.subr.mxu0 0.0
    %427 = vmatpush2.xpose.msra.mxu0 0.0
    %428 = vmatprep.subr.mxu0 0.0
    %429 = vmatpush2.xpose.msra.mxu0 0.0
    %430 = vmatprep.subr.mxu0 0.0
    %431 = vmatpush2.xpose.msra.mxu0 0.0
    %432 = vmatprep.subr.mxu0 0.0
    %433 = vmatpush2.xpose.msra.mxu0 0.0
    %434 = vmatprep.mubr.f32.mxu0 0.0
    %v435 = vand.u32 %v46, 4294901760
    %v436 = vsub.f32 %v46, %v435
    %437 = vmatmul.mubr.f32.gmra.mxu0 %v436
    %v438 = vpop.f32.mrf.mxu0
    %v439 = vadd.f32 %v335, %v438
    %v440 = vpop.f32.mrf.mxu0
    %441 = vdwg.mxu0
    %442 = vmatprep.subr.mxu0 0.0
    %v443 = vand.u32 %v94, 4294901760
    %444 = vmatpush1.xpose.msra.mxu0 %v443
    %445 = vmatprep.subr.mxu0 0.0
    %v446 = vand.u32 %v91, 4294901760
    %447 = vmatpush1.xpose.msra.mxu0 %v446
    %448 = vmatprep.subr.mxu0 0.0
    %v449 = vand.u32 %v88, 4294901760
    %450 = vmatpush1.xpose.msra.mxu0 %v449
    %451 = vmatprep.subr.mxu0 0.0
    %v452 = vand.u32 %v85, 4294901760
    %453 = vmatpush1.xpose.msra.mxu0 %v452
    %454 = vmatprep.subr.mxu0 0.0
    %v455 = vand.u32 %v82, 4294901760
    %456 = vmatpush1.xpose.msra.mxu0 %v455
    %457 = vmatprep.subr.mxu0 0.0
    %v458 = vand.u32 %v79, 4294901760
    %459 = vmatpush1.xpose.msra.mxu0 %v458
    %460 = vmatprep.subr.mxu0 0.0
    %v461 = vand.u32 %v76, 4294901760
    %462 = vmatpush1.xpose.msra.mxu0 %v461
    %463 = vmatprep.subr.mxu0 0.0
    %v464 = vand.u32 %v73, 4294901760
    %465 = vmatpush1.xpose.msra.mxu0 %v464
    %466 = vmatprep.subr.mxu0 0.0
    %v467 = vand.u32 %v70, 4294901760
    %468 = vmatpush1.xpose.msra.mxu0 %v467
    %469 = vmatprep.subr.mxu0 0.0
    %v470 = vand.u32 %v67, 4294901760
    %471 = vmatpush1.xpose.msra.mxu0 %v470
    %472 = vmatprep.subr.mxu0 0.0
    %v473 = vand.u32 %v64, 4294901760
    %474 = vmatpush1.xpose.msra.mxu0 %v473
    %475 = vmatprep.subr.mxu0 0.0
    %v476 = vand.u32 %v61, 4294901760
    %477 = vmatpush1.xpose.msra.mxu0 %v476
    %478 = vmatprep.subr.mxu0 0.0
    %v479 = vand.u32 %v58, 4294901760
    %480 = vmatpush1.xpose.msra.mxu0 %v479
    %481 = vmatprep.subr.mxu0 0.0
    %v482 = vand.u32 %v55, 4294901760
    %483 = vmatpush1.xpose.msra.mxu0 %v482
    %484 = vmatprep.subr.mxu0 0.0
    %v485 = vand.u32 %v52, 4294901760
    %486 = vmatpush1.xpose.msra.mxu0 %v485
    %487 = vmatprep.subr.mxu0 0.0
    %v488 = vand.u32 %v49, 4294901760
    %489 = vmatpush1.xpose.msra.mxu0 %v488
    %490 = vmatprep.subr.mxu0 0.0
    %491 = vmatpush2.xpose.msra.mxu0 0.0
    %492 = vmatprep.subr.mxu0 0.0
    %493 = vmatpush2.xpose.msra.mxu0 0.0
    %494 = vmatprep.subr.mxu0 0.0
    %495 = vmatpush2.xpose.msra.mxu0 0.0
    %496 = vmatprep.subr.mxu0 0.0
    %497 = vmatpush2.xpose.msra.mxu0 0.0
    %498 = vmatprep.subr.mxu0 0.0
    %499 = vmatpush2.xpose.msra.mxu0 0.0
    %500 = vmatprep.subr.mxu0 0.0
    %501 = vmatpush2.xpose.msra.mxu0 0.0
    %502 = vmatprep.subr.mxu0 0.0
    %503 = vmatpush2.xpose.msra.mxu0 0.0
    %504 = vmatprep.subr.mxu0 0.0
    %505 = vmatpush2.xpose.msra.mxu0 0.0
    %506 = vmatprep.subr.mxu0 0.0
    %507 = vmatpush2.xpose.msra.mxu0 0.0
    %508 = vmatprep.subr.mxu0 0.0
    %509 = vmatpush2.xpose.msra.mxu0 0.0
    %510 = vmatprep.subr.mxu0 0.0
    %511 = vmatpush2.xpose.msra.mxu0 0.0
    %512 = vmatprep.subr.mxu0 0.0
    %513 = vmatpush2.xpose.msra.mxu0 0.0
    %514 = vmatprep.subr.mxu0 0.0
    %515 = vmatpush2.xpose.msra.mxu0 0.0
    %516 = vmatprep.subr.mxu0 0.0
    %517 = vmatpush2.xpose.msra.mxu0 0.0
    %518 = vmatprep.subr.mxu0 0.0
    %519 = vmatpush2.xpose.msra.mxu0 0.0
    %520 = vmatprep.subr.mxu0 0.0
    %521 = vmatpush2.xpose.msra.mxu0 0.0
    %522 = vmatprep.mubr.f32.mxu0 0.0
    %v523 = vand.u32 %v46, 4294901760
    %v524 = vsub.f32 %v46, %v523
    %v525 = vand.u32 %v524, 4294901760
    %526 = vmatmul.mubr.f32.gmra.mxu0 %v525
    %v527 = vpop.f32.mrf.mxu0
    %v528 = vadd.f32 %v439, %v527
    %v529 = vpop.f32.mrf.mxu0
    %530 = vdwg.mxu0
    %531 = vmatprep.subr.mxu0 0.0
    %v532 = vand.u32 %v94, 4294901760
    %v533 = vsub.f32 %v94, %v532
    %v534 = vand.u32 %v533, 4294901760
    %535 = vmatpush1.xpose.msra.mxu0 %v534
    %536 = vmatprep.subr.mxu0 0.0
    %v537 = vand.u32 %v91, 4294901760
    %v538 = vsub.f32 %v91, %v537
    %v539 = vand.u32 %v538, 4294901760
    %540 = vmatpush1.xpose.msra.mxu0 %v539
    %541 = vmatprep.subr.mxu0 0.0
    %v542 = vand.u32 %v88, 4294901760
    %v543 = vsub.f32 %v88, %v542
    %v544 = vand.u32 %v543, 4294901760
    %545 = vmatpush1.xpose.msra.mxu0 %v544
    %546 = vmatprep.subr.mxu0 0.0
    %v547 = vand.u32 %v85, 4294901760
    %v548 = vsub.f32 %v85, %v547
    %v549 = vand.u32 %v548, 4294901760
    %550 = vmatpush1.xpose.msra.mxu0 %v549
    %551 = vmatprep.subr.mxu0 0.0
    %v552 = vand.u32 %v82, 4294901760
    %v553 = vsub.f32 %v82, %v552
    %v554 = vand.u32 %v553, 4294901760
    %555 = vmatpush1.xpose.msra.mxu0 %v554
    %556 = vmatprep.subr.mxu0 0.0
    %v557 = vand.u32 %v79, 4294901760
    %v558 = vsub.f32 %v79, %v557
    %v559 = vand.u32 %v558, 4294901760
    %560 = vmatpush1.xpose.msra.mxu0 %v559
    %561 = vmatprep.subr.mxu0 0.0
    %v562 = vand.u32 %v76, 4294901760
    %v563 = vsub.f32 %v76, %v562
    %v564 = vand.u32 %v563, 4294901760
    %565 = vmatpush1.xpose.msra.mxu0 %v564
    %566 = vmatprep.subr.mxu0 0.0
    %v567 = vand.u32 %v73, 4294901760
    %v568 = vsub.f32 %v73, %v567
    %v569 = vand.u32 %v568, 4294901760
    %570 = vmatpush1.xpose.msra.mxu0 %v569
    %571 = vmatprep.subr.mxu0 0.0
    %v572 = vand.u32 %v70, 4294901760
    %v573 = vsub.f32 %v70, %v572
    %v574 = vand.u32 %v573, 4294901760
    %575 = vmatpush1.xpose.msra.mxu0 %v574
    %576 = vmatprep.subr.mxu0 0.0
    %v577 = vand.u32 %v67, 4294901760
    %v578 = vsub.f32 %v67, %v577
    %v579 = vand.u32 %v578, 4294901760
    %580 = vmatpush1.xpose.msra.mxu0 %v579
    %581 = vmatprep.subr.mxu0 0.0
    %v582 = vand.u32 %v64, 4294901760
    %v583 = vsub.f32 %v64, %v582
    %v584 = vand.u32 %v583, 4294901760
    %585 = vmatpush1.xpose.msra.mxu0 %v584
    %586 = vmatprep.subr.mxu0 0.0
    %v587 = vand.u32 %v61, 4294901760
    %v588 = vsub.f32 %v61, %v587
    %v589 = vand.u32 %v588, 4294901760
    %590 = vmatpush1.xpose.msra.mxu0 %v589
    %591 = vmatprep.subr.mxu0 0.0
    %v592 = vand.u32 %v58, 4294901760
    %v593 = vsub.f32 %v58, %v592
    %v594 = vand.u32 %v593, 4294901760
    %595 = vmatpush1.xpose.msra.mxu0 %v594
    %596 = vmatprep.subr.mxu0 0.0
    %v597 = vand.u32 %v55, 4294901760
    %v598 = vsub.f32 %v55, %v597
    %v599 = vand.u32 %v598, 4294901760
    %600 = vmatpush1.xpose.msra.mxu0 %v599
    %601 = vmatprep.subr.mxu0 0.0
    %v602 = vand.u32 %v52, 4294901760
    %v603 = vsub.f32 %v52, %v602
    %v604 = vand.u32 %v603, 4294901760
    %605 = vmatpush1.xpose.msra.mxu0 %v604
    %606 = vmatprep.subr.mxu0 0.0
    %v607 = vand.u32 %v49, 4294901760
    %v608 = vsub.f32 %v49, %v607
    %v609 = vand.u32 %v608, 4294901760
    %610 = vmatpush1.xpose.msra.mxu0 %v609
    %611 = vmatprep.subr.mxu0 0.0
    %612 = vmatpush2.xpose.msra.mxu0 0.0
    %613 = vmatprep.subr.mxu0 0.0
    %614 = vmatpush2.xpose.msra.mxu0 0.0
    %615 = vmatprep.subr.mxu0 0.0
    %616 = vmatpush2.xpose.msra.mxu0 0.0
    %617 = vmatprep.subr.mxu0 0.0
    %618 = vmatpush2.xpose.msra.mxu0 0.0
    %619 = vmatprep.subr.mxu0 0.0
    %620 = vmatpush2.xpose.msra.mxu0 0.0
    %621 = vmatprep.subr.mxu0 0.0
    %622 = vmatpush2.xpose.msra.mxu0 0.0
    %623 = vmatprep.subr.mxu0 0.0
    %624 = vmatpush2.xpose.msra.mxu0 0.0
    %625 = vmatprep.subr.mxu0 0.0
    %626 = vmatpush2.xpose.msra.mxu0 0.0
    %627 = vmatprep.subr.mxu0 0.0
    %628 = vmatpush2.xpose.msra.mxu0 0.0
    %629 = vmatprep.subr.mxu0 0.0
    %630 = vmatpush2.xpose.msra.mxu0 0.0
    %631 = vmatprep.subr.mxu0 0.0
    %632 = vmatpush2.xpose.msra.mxu0 0.0
    %633 = vmatprep.subr.mxu0 0.0
    %634 = vmatpush2.xpose.msra.mxu0 0.0
    %635 = vmatprep.subr.mxu0 0.0
    %636 = vmatpush2.xpose.msra.mxu0 0.0
    %637 = vmatprep.subr.mxu0 0.0
    %638 = vmatpush2.xpose.msra.mxu0 0.0
    %639 = vmatprep.subr.mxu0 0.0
    %640 = vmatpush2.xpose.msra.mxu0 0.0
    %641 = vmatprep.subr.mxu0 0.0
    %642 = vmatpush2.xpose.msra.mxu0 0.0
    %643 = vmatprep.mubr.f32.mxu0 0.0
    %v644 = vand.u32 %v46, 4294901760
    %645 = vmatmul.mubr.f32.gmra.mxu0 %v644
    %v646 = vpop.f32.mrf.mxu0
    %v647 = vadd.f32 %v528, %v646
    %v648 = vpop.f32.mrf.mxu0
    %649 = vdwg.mxu0
    %650 = vmatprep.subr.mxu0 0.0
    %v651 = vand.u32 %v94, 4294901760
    %652 = vmatpush1.xpose.msra.mxu0 %v651
    %653 = vmatprep.subr.mxu0 0.0
    %v654 = vand.u32 %v91, 4294901760
    %655 = vmatpush1.xpose.msra.mxu0 %v654
    %656 = vmatprep.subr.mxu0 0.0
    %v657 = vand.u32 %v88, 4294901760
    %658 = vmatpush1.xpose.msra.mxu0 %v657
    %659 = vmatprep.subr.mxu0 0.0
    %v660 = vand.u32 %v85, 4294901760
    %661 = vmatpush1.xpose.msra.mxu0 %v660
    %662 = vmatprep.subr.mxu0 0.0
    %v663 = vand.u32 %v82, 4294901760
    %664 = vmatpush1.xpose.msra.mxu0 %v663
    %665 = vmatprep.subr.mxu0 0.0
    %v666 = vand.u32 %v79, 4294901760
    %667 = vmatpush1.xpose.msra.mxu0 %v666
    %668 = vmatprep.subr.mxu0 0.0
    %v669 = vand.u32 %v76, 4294901760
    %670 = vmatpush1.xpose.msra.mxu0 %v669
    %671 = vmatprep.subr.mxu0 0.0
    %v672 = vand.u32 %v73, 4294901760
    %673 = vmatpush1.xpose.msra.mxu0 %v672
    %674 = vmatprep.subr.mxu0 0.0
    %v675 = vand.u32 %v70, 4294901760
    %676 = vmatpush1.xpose.msra.mxu0 %v675
    %677 = vmatprep.subr.mxu0 0.0
    %v678 = vand.u32 %v67, 4294901760
    %679 = vmatpush1.xpose.msra.mxu0 %v678
    %680 = vmatprep.subr.mxu0 0.0
    %v681 = vand.u32 %v64, 4294901760
    %682 = vmatpush1.xpose.msra.mxu0 %v681
    %683 = vmatprep.subr.mxu0 0.0
    %v684 = vand.u32 %v61, 4294901760
    %685 = vmatpush1.xpose.msra.mxu0 %v684
    %686 = vmatprep.subr.mxu0 0.0
    %v687 = vand.u32 %v58, 4294901760
    %688 = vmatpush1.xpose.msra.mxu0 %v687
    %689 = vmatprep.subr.mxu0 0.0
    %v690 = vand.u32 %v55, 4294901760
    %691 = vmatpush1.xpose.msra.mxu0 %v690
    %692 = vmatprep.subr.mxu0 0.0
    %v693 = vand.u32 %v52, 4294901760
    %694 = vmatpush1.xpose.msra.mxu0 %v693
    %695 = vmatprep.subr.mxu0 0.0
    %v696 = vand.u32 %v49, 4294901760
    %697 = vmatpush1.xpose.msra.mxu0 %v696
    %698 = vmatprep.subr.mxu0 0.0
    %699 = vmatpush2.xpose.msra.mxu0 0.0
    %700 = vmatprep.subr.mxu0 0.0
    %701 = vmatpush2.xpose.msra.mxu0 0.0
    %702 = vmatprep.subr.mxu0 0.0
    %703 = vmatpush2.xpose.msra.mxu0 0.0
    %704 = vmatprep.subr.mxu0 0.0
    %705 = vmatpush2.xpose.msra.mxu0 0.0
    %706 = vmatprep.subr.mxu0 0.0
    %707 = vmatpush2.xpose.msra.mxu0 0.0
    %708 = vmatprep.subr.mxu0 0.0
    %709 = vmatpush2.xpose.msra.mxu0 0.0
    %710 = vmatprep.subr.mxu0 0.0
    %711 = vmatpush2.xpose.msra.mxu0 0.0
    %712 = vmatprep.subr.mxu0 0.0
    %713 = vmatpush2.xpose.msra.mxu0 0.0
    %714 = vmatprep.subr.mxu0 0.0
    %715 = vmatpush2.xpose.msra.mxu0 0.0
    %716 = vmatprep.subr.mxu0 0.0
    %717 = vmatpush2.xpose.msra.mxu0 0.0
    %718 = vmatprep.subr.mxu0 0.0
    %719 = vmatpush2.xpose.msra.mxu0 0.0
    %720 = vmatprep.subr.mxu0 0.0
    %721 = vmatpush2.xpose.msra.mxu0 0.0
    %722 = vmatprep.subr.mxu0 0.0
    %723 = vmatpush2.xpose.msra.mxu0 0.0
    %724 = vmatprep.subr.mxu0 0.0
    %725 = vmatpush2.xpose.msra.mxu0 0.0
    %726 = vmatprep.subr.mxu0 0.0
    %727 = vmatpush2.xpose.msra.mxu0 0.0
    %728 = vmatprep.subr.mxu0 0.0
    %729 = vmatpush2.xpose.msra.mxu0 0.0
    %730 = vmatprep.mubr.f32.mxu0 0.0
    %v731 = vand.u32 %v46, 4294901760
    %732 = vmatmul.mubr.f32.gmra.mxu0 %v731
    %v733 = vpop.f32.mrf.mxu0
    %v734 = vadd.f32 %v647, %v733
    %v735 = vpop.f32.mrf.mxu0
    %736 = vdwg.mxu0
    %v737 = vld [vmem:[%s2] sm:$0x3]
    %739 = vset.pattern.permute.xlu0 0
    %740 = vperm.xlu0 %739, %v737
    %v741 = vpop.permute.xlu0 %740
    %v743 = vadd.f32 %v734, %v741
    %744 = vst [vmem:[#allocation5] sm:$0x3] %v743
    // Predicated region
    $region18: #{tpu_custom_call.1} parent=1 // pred_check
      _
    $region19: #{tpu_custom_call.1} parent=1 // pred_check_branch
      %746 = sbr.rel (0) target = $region21
    $region20: #{tpu_custom_call.1} parent=1 // pred_region
      %s748 = ssub.s32 32, 32
      %749 = vsyncadd [#allocation4], %s748
      %s751 = sshll.u32 [#allocation5], 4
      %s752 = int_to_ptr.vmem [resolvable:$true] %s751
      %754 = dma.vmem_to_hbm [thread:$0]  %s752, 32, %s3, [#allocation4]
    $region21: #{tpu_custom_call.1} parent=1 // pred_fallthru
      _
    // Predicated region
    $region22: #{tpu_custom_call.1} parent=1 // pred_check
      _
    $region23: #{tpu_custom_call.1} parent=1 // pred_check_branch
      %756 = sbr.rel (0) target = $region25
    $region24: #{tpu_custom_call.1} parent=1 // pred_region
      %757 = dma.done [#allocation4], 32
    $region25: #{tpu_custom_call.1} parent=1 // pred_fallthru
      _
    %758 = vsyncpa [#allocation3], 1
    %759 = vsyncpa [#allocation4], 1

</llo_original>
